<compile_context>
chip_gen: v7x
topology: tpu7x:2x2x1
jax: 0.10.0
libtpu: 0.0.40
codegen_flags: <defaults>
</compile_context>

<pallas_src>
import jax
import jax.numpy as jnp
from jax.experimental import pallas as pl
from jax.experimental.pallas import tpu as pltpu


def _round_up(x, m):
    return ((x + m - 1) // m) * m


def _matmul_bias_kernel(x_ref, w_ref, b_ref, o_ref):
    # x_ref: (TM, K) bf16, w_ref: (K, Np) bf16, b_ref: (1, Np) f32, o_ref: (TM, Np) f32
    acc = jnp.dot(x_ref[...], w_ref[...], preferred_element_type=jnp.float32)
    o_ref[...] = (acc + b_ref[...]).astype(o_ref.dtype)


def _patch_proj_matmul(patches_bf16, w_kn_bf16, bias_1n_f32, tm):
    """patches: (Mp, K) bf16, w: (K, Np) bf16, bias: (1, Np) f32 -> (Mp, Np) f32."""
    Mp, K = patches_bf16.shape
    Np = w_kn_bf16.shape[1]
    grid = (Mp // tm,)
    return pl.pallas_call(
        _matmul_bias_kernel,
        out_shape=jax.ShapeDtypeStruct((Mp, Np), jnp.float32),
        grid_spec=pltpu.PrefetchScalarGridSpec(
            num_scalar_prefetch=0,
            grid=grid,
            in_specs=[
                pl.BlockSpec((tm, K), lambda i: (i, 0)),     # streamed, double-buffered
                pl.BlockSpec((K, Np), lambda i: (0, 0)),     # resident across all steps
                pl.BlockSpec((1, Np), lambda i: (0, 0)),     # resident across all steps
            ],
            out_specs=pl.BlockSpec((tm, Np), lambda i: (i, 0)),
        ),
        compiler_params=pltpu.CompilerParams(
            dimension_semantics=("parallel",)),
        cost_estimate=pl.CostEstimate(
            flops=2 * Mp * K * Np,
            transcendentals=0,
            bytes_accessed=Mp * K * 2 + K * Np * 2 + Np * 4 + Mp * Np * 4),
    )(patches_bf16, w_kn_bf16, bias_1n_f32)


class PatchEmbedPallas:
    """2D Image to Patch Embedding (norm_layer=None -> Identity)."""

    # Target M-tile size for the GEMM (rows per grid step). Tile VMEM footprint:
    # ~TM*K*2 (bf16 in) + TM*Np*4 (f32 out), double-buffered -> a few MB, safe on
    # v5e/v6e (32 MiB scoped default) and v7x (64 MiB physical).
    TM_TARGET = 2048

    def __init__(self, patch_size=4, in_c=3, embed_dim=96, key=None):
        self.patch_size = (patch_size, patch_size)
        self.in_chans = in_c
        self.embed_dim = embed_dim
        if key is None:
            key = jax.random.PRNGKey(0)
        kw, kb = jax.random.split(key)
        # Deterministic synthetic init mimicking Conv2d's default shapes:
        # weight (embed_dim, in_c, p, p), bias (embed_dim,)
        fan_in = in_c * patch_size * patch_size
        bound = 1.0 / jnp.sqrt(fan_in)
        self.weight = jax.random.uniform(
            kw, (embed_dim, in_c, patch_size, patch_size),
            minval=-bound, maxval=bound, dtype=jnp.float32)
        self.bias = jax.random.uniform(
            kb, (embed_dim,), minval=-bound, maxval=bound, dtype=jnp.float32)

        # Precompute the GEMM-form weight/bias once (lane-dense, bf16 weight).
        ph, pw = self.patch_size
        K = ph * pw * in_c
        Np = _round_up(embed_dim, 128)          # pad embed_dim -> multiple of 128
        # (E, C, ph, pw) -> (E, ph, pw, C) -> (E, K) -> (K, E), matching the
        # NHWC patch-flatten order (ph, pw, C).
        w_kn = self.weight.transpose(0, 2, 3, 1).reshape(embed_dim, K).T
        self._w_kn = jnp.pad(w_kn, ((0, 0), (0, Np - embed_dim))).astype(jnp.bfloat16)
        self._bias_1n = jnp.pad(self.bias, (0, Np - embed_dim)).reshape(1, Np)
        self._n_pad = Np

    def __call__(self, x):
        # x: (B, C, H, W)  -- NCHW, same as PyTorch
        B, C, H, W = x.shape
        ph, pw = self.patch_size
        # Pad bottom / right if H or W not divisible by patch size
        # (matches F.pad(x, (0, pw - W % pw, 0, ph - H % ph, 0, 0))).
        pad_h = (-H) % ph
        pad_w = (-W) % pw
        if pad_h or pad_w:
            x = jnp.pad(x, ((0, 0), (0, 0), (0, pad_h), (0, pad_w)))
            H, W = H + pad_h, W + pad_w
        Hp, Wp = H // ph, W // pw
        M = B * Hp * Wp
        K = ph * pw * C

        # Cast early (halves HBM traffic of the layout shuffle), go NHWC so the
        # patch flatten is a cheap local axis swap.
        x_bf = x.astype(jnp.bfloat16)
        x_nhwc = jnp.transpose(x_bf, (0, 2, 3, 1))                  # (B, H, W, C)
        patches = x_nhwc.reshape(B, Hp, ph, Wp, pw, C)
        patches = jnp.transpose(patches, (0, 1, 3, 2, 4, 5))        # (B, Hp, Wp, ph, pw, C)
        patches = patches.reshape(M, K)

        # Tile over M; pad M with zero rows so every block is full.
        tm = min(self.TM_TARGET, _round_up(M, 16))
        Mp = _round_up(M, tm)
        if Mp != M:
            patches = jnp.pad(patches, ((0, Mp - M), (0, 0)))

        out = _patch_proj_matmul(patches, self._w_kn, self._bias_1n, tm)  # (Mp, Np) f32
        out = out[:M, :self.embed_dim].reshape(B, Hp * Wp, self.embed_dim)
        # norm is Identity (norm_layer=None in the reference config)
        return out, Hp, Wp


def _reference(x, weight, bias, patch_size):
    """Pure-JAX f32 reference of the PyTorch forward for correctness check."""
    B, C, H, W = x.shape
    ph, pw = patch_size
    pad_h, pad_w = (-H) % ph, (-W) % pw
    if pad_h or pad_w:
        x = jnp.pad(x, ((0, 0), (0, 0), (0, pad_h), (0, pad_w)))
    y = jax.lax.conv_general_dilated(
        x, weight, window_strides=(ph, pw), padding="VALID",
        dimension_numbers=("NCHW", "OIHW", "NCHW"))
    y = y + bias[None, :, None, None]
    Bc, E, Hp, Wp = y.shape
    y = y.reshape(Bc, E, Hp * Wp).transpose(0, 2, 1)
    return y, Hp, Wp


if __name__ == "__main__":
    key = jax.random.PRNGKey(0)
    k_in, k_par = jax.random.split(key)

    # small shapes: batch=2, in_c=4, spatial=16x16, patch=4, embed_dim=32
    x = jax.random.normal(k_in, (2, 4, 16, 16), dtype=jnp.float32)

    mod = PatchEmbedPallas(patch_size=4, in_c=4, embed_dim=32, key=k_par)

    out, Hp, Wp = mod(x)
    out = jax.block_until_ready(out)

    ref, Hr, Wr = _reference(x, mod.weight, mod.bias, mod.patch_size)
    assert (Hp, Wp) == (Hr, Wr) == (4, 4)
    assert out.shape == (2, 16, 32)
    # bf16 inputs with f32 accumulation -> relaxed tolerance vs f32 reference.
    assert jnp.allclose(out, ref, atol=3e-2, rtol=3e-2)

    print("KERNEL_OK")
</pallas_src>

<mosaic_0001>
module attributes {stable_mosaic.version = 11 : i64} {
  func.func @_matmul_bias_kernel(%arg0: i32, %arg1: memref<32x64xbf16, #tpu.memory_space<vmem>>, %arg2: memref<64x128xbf16, #tpu.memory_space<vmem>>, %arg3: memref<1x128xf32, #tpu.memory_space<vmem>>, %arg4: memref<32x128xf32, #tpu.memory_space<vmem>>) attributes {dimension_semantics = [#tpu.dimension_semantics<parallel>], iteration_bounds = array<i64: 1>, scalar_prefetch = 0 : i64, scratch_operands = 0 : i64, tpu.core_type = #tpu.core_type<tc>, window_params = [{transform_indices = @transform_0, window_bounds = array<i64: 32, 64>}, {pipeline_mode = #tpu.pipeline_mode<synchronous>, transform_indices = @transform_1, window_bounds = array<i64: 64, 128>}, {pipeline_mode = #tpu.pipeline_mode<synchronous>, transform_indices = @transform_2, window_bounds = array<i64: 1, 128>}, {transform_indices = @transform_3, window_bounds = array<i64: 32, 128>}]} {
    %c0 = arith.constant 0 : index
    %c0_0 = arith.constant 0 : index
    %0 = vector.load %arg1[%c0, %c0_0] : memref<32x64xbf16, #tpu.memory_space<vmem>>, vector<32x64xbf16>
    %c0_1 = arith.constant 0 : index
    %c0_2 = arith.constant 0 : index
    %1 = vector.load %arg2[%c0_1, %c0_2] : memref<64x128xbf16, #tpu.memory_space<vmem>>, vector<64x128xbf16>
    %cst = arith.constant dense<0.000000e+00> : vector<32x128xf32>
    %2 = tpu.matmul %0, %1, %cst {dimension_numbers = #tpu.dot_dimension_numbers<[1], [0], [0], [1], [0, 0, 1, 1], [], []>} : vector<32x64xbf16>, vector<64x128xbf16>, vector<32x128xf32> -> vector<32x128xf32>
    %c0_3 = arith.constant 0 : index
    %c0_4 = arith.constant 0 : index
    %3 = vector.load %arg3[%c0_3, %c0_4] : memref<1x128xf32, #tpu.memory_space<vmem>>, vector<1x128xf32>
    %4 = vector.broadcast %3 : vector<1x128xf32> to vector<32x128xf32>
    %5 = arith.addf %2, %4 : vector<32x128xf32>
    %c0_5 = arith.constant 0 : index
    %c0_6 = arith.constant 0 : index
    %6 = vector.load %arg4[%c0_5, %c0_6] : memref<32x128xf32, #tpu.memory_space<vmem>>, vector<32x128xf32>
    tpu.vector_store %arg4[%c0_5, %c0_6], %5 {strides = array<i32>} : memref<32x128xf32, #tpu.memory_space<vmem>>, vector<32x128xf32>,
    return
  }
  func.func @transform_0(%arg0: i32) -> (i32, i32) {
    %c0_i32 = arith.constant 0 : i32
    %c0_i32_0 = arith.constant 0 : i32
    return %arg0, %c0_i32 : i32, i32
  }
  func.func @transform_1(%arg0: i32) -> (i32, i32) {
    %c0_i32 = arith.constant 0 : i32
    %c0_i32_0 = arith.constant 0 : i32
    %c0_i32_1 = arith.constant 0 : i32
    return %c0_i32, %c0_i32_0 : i32, i32
  }
  func.func @transform_2(%arg0: i32) -> (i32, i32) {
    %c0_i32 = arith.constant 0 : i32
    %c0_i32_0 = arith.constant 0 : i32
    %c0_i32_1 = arith.constant 0 : i32
    return %c0_i32, %c0_i32_0 : i32, i32
  }
  func.func @transform_3(%arg0: i32) -> (i32, i32) {
    %c0_i32 = arith.constant 0 : i32
    %c0_i32_0 = arith.constant 0 : i32
    return %arg0, %c0_i32 : i32, i32
  }
}

</mosaic_0001>

<llo_original>
// kernel: tpu_custom_call.1
$region0: #{tpu_custom_call.1}
  #allocation0 [shape = 'u32[]', space=smem, size = 0x4, offset = 0x4, fixed_abs, tag = 'smem constant byte address 0x4 - core index']
  #allocation1 [shape = 'u32[144,128]{1,0:T(1,128)}', space=vmem, size = 0x12000, scoped, tag = 'internal scratch']
  %s0 = inlined_call_operand.hbm [shape: bf16[32,64], index: 0, kind: input, shape index: {}]
  %s1 = inlined_call_operand.hbm [shape: bf16[64,128], index: 1, kind: input, shape index: {}]
  %s2 = inlined_call_operand.vmem [shape: f32[1,128], index: 2, kind: input, shape index: {}]
  %s3 = inlined_call_operand.hbm [shape: f32[32,128], index: 3, kind: output, shape index: {}]
  %s4 = sld [smem:[#allocation0]]
  $region30: #{tpu_custom_call.1} parent=0
    _
  %s6 = ssub.s32 1, %s4
  %s7 = scalar_select 0, %s6, %s4
  $region1: #{tpu_custom_call.1} parent=0
    #allocation2 [shape = 'u8[8192]{0}', space=vmem, size = 0x2000, scoped, tag = 'input window, operand 0, single buffered']
    #allocation3 [shape = 's32[1]{0}', space=sflag, size = 0x4, scoped, tag = 'scoped memory for tpu_custom_call.1']
    #allocation4 [shape = 's32[1]{0}', space=sflag, size = 0x4, scoped, tag = 'scoped memory for tpu_custom_call.1']
    #allocation5 [shape = 'u8[16384]{0}', space=vmem, size = 0x4000, scoped, tag = 'input window, operand 1, single buffered']
    #allocation6 [shape = 's32[1]{0}', space=sflag, size = 0x4, scoped, tag = 'scoped memory for tpu_custom_call.1']
    #allocation7 [shape = 'u8[16384]{0}', space=vmem, size = 0x4000, scoped, tag = 'output window, operand 0, single buffered']
    %8 = vsyncpa [#allocation3], 0
    %9 = vsyncpa [#allocation6], 0
    %10 = vsyncpa [#allocation4], 0
    // Predicated region
    $region2: #{tpu_custom_call.1} parent=1 // pred_check
      _
    $region3: #{tpu_custom_call.1} parent=1 // pred_check_branch
      %12 = sbr.rel (0) target = $region5
    $region4: #{tpu_custom_call.1} parent=1 // pred_region
      %s14 = ssub.s32 256, 256
      %15 = vsyncadd [#allocation3], %s14
      %s16 = sshll.u32 [#allocation2], 4
      %s17 = int_to_ptr.vmem [resolvable:$true] %s16
      %22 = dma.hbm_to_vmem [thread:$0]  %s0, 256, %s17, [#allocation3], 64, 64, 4
    $region5: #{tpu_custom_call.1} parent=1 // pred_fallthru
      _
    // Predicated region
    $region6: #{tpu_custom_call.1} parent=1 // pred_check
      _
    $region7: #{tpu_custom_call.1} parent=1 // pred_check_branch
      %24 = sbr.rel (0) target = $region9
    $region8: #{tpu_custom_call.1} parent=1 // pred_region
      %s26 = ssub.s32 512, 512
      %27 = vsyncadd [#allocation6], %s26
      %s28 = sshll.u32 [#allocation5], 4
      %s29 = int_to_ptr.vmem [resolvable:$true] %s28
      %34 = dma.hbm_to_vmem [thread:$0]  %s1, 512, %s29, [#allocation6], 64, 64, 4
    $region9: #{tpu_custom_call.1} parent=1 // pred_fallthru
      _
    // Predicated region
    $region10: #{tpu_custom_call.1} parent=1 // pred_check
      _
    $region11: #{tpu_custom_call.1} parent=1 // pred_check_branch
      %36 = sbr.rel (0) target = $region13
    $region12: #{tpu_custom_call.1} parent=1 // pred_region
      _
    $region13: #{tpu_custom_call.1} parent=1 // pred_fallthru
      _
    // Predicated region
    $region14: #{tpu_custom_call.1} parent=1 // pred_check
      _
    $region15: #{tpu_custom_call.1} parent=1 // pred_check_branch
      %38 = sbr.rel (0) target = $region17
    $region16: #{tpu_custom_call.1} parent=1 // pred_region
      %39 = dma.done [#allocation3], 256
    $region17: #{tpu_custom_call.1} parent=1 // pred_fallthru
      _
    // Predicated region
    $region18: #{tpu_custom_call.1} parent=1 // pred_check
      _
    $region19: #{tpu_custom_call.1} parent=1 // pred_check_branch
      %41 = sbr.rel (0) target = $region21
    $region20: #{tpu_custom_call.1} parent=1 // pred_region
      %42 = dma.done [#allocation6], 512
    $region21: #{tpu_custom_call.1} parent=1 // pred_fallthru
      _
    %v44 = vld [vmem:[#allocation2] sm:$0xf]
    %v45 = vld [vmem:[#allocation2 + $0x4] sm:$0xf]
    %v46 = vld [vmem:[#allocation2 + $0x8] sm:$0xf]
    %v47 = vld [vmem:[#allocation2 + $0xc] sm:$0xf]
    %v48 = vld [vmem:[#allocation5] sm:$0xf]
    %v49 = vld [vmem:[#allocation5 + $0x4] sm:$0xf]
    %v50 = vld [vmem:[#allocation5 + $0x8] sm:$0xf]
    %v51 = vld [vmem:[#allocation5 + $0xc] sm:$0xf]
    %v52 = vld [vmem:[#allocation5 + $0x10] sm:$0xf]
    %v53 = vld [vmem:[#allocation5 + $0x14] sm:$0xf]
    %v54 = vld [vmem:[#allocation5 + $0x18] sm:$0xf]
    %v55 = vld [vmem:[#allocation5 + $0x1c] sm:$0xf]
    %v56 = vld [vmem:[%s2] sm:$0x1]
    %v58 = vlaneseq
    %v59 = vshrl.u32 %v58, 7
    %v60 = vsub.s32 0, %v59
    %v61 = vrot.slane %v56, %v60
    %v67 = vunpack.c.l.b16 %v44
    %v68 = vunpack.c.l.b16 %v45
    %v69 = vunpack.c.l.b16 %v46
    %v70 = vunpack.c.l.b16 %v47
    %v71 = vpack.c.b16 %v68, %v67
    %v72 = vpack.c.b16 %v70, %v69
    %v81 = vunpack.c.l.b16 %v48
    %v82 = vunpack.c.l.b16 %v49
    %v83 = vunpack.c.l.b16 %v50
    %v84 = vunpack.c.l.b16 %v51
    %v85 = vunpack.c.l.b16 %v52
    %v86 = vunpack.c.l.b16 %v53
    %v87 = vunpack.c.l.b16 %v54
    %v88 = vunpack.c.l.b16 %v55
    %v89 = vpack.c.b16 %v82, %v81
    %v90 = vpack.c.b16 %v84, %v83
    %v91 = vpack.c.b16 %v86, %v85
    %v92 = vpack.c.b16 %v88, %v87
    %vm97 = vcmask 523264
    %v99 = vsel %vm97, %v71, 0
    %v102 = vsel %vm97, %v72, 0
    %104 = vmatprep.subr.bf16.mxu0 0
    %105 = vmatpush1.bf16.msra.mxu0 %v89
    %106 = vmatprep.subr.bf16.mxu0 0
    %107 = vmatpush1.bf16.msra.mxu0 %v90
    %108 = vmatprep.subr.bf16.mxu0 0
    %109 = vmatpush1.bf16.msra.mxu0 %v91
    %110 = vmatprep.subr.bf16.mxu0 0
    %111 = vmatpush1.bf16.msra.mxu0 %v92
    %112 = vmatprep.subr.bf16.mxu0 0
    %113 = vmatpush1.bf16.msra.mxu0 0
    %114 = vmatprep.subr.bf16.mxu0 0
    %115 = vmatpush1.bf16.msra.mxu0 0
    %116 = vmatprep.subr.bf16.mxu0 0
    %117 = vmatpush1.bf16.msra.mxu0 0
    %118 = vmatprep.subr.bf16.mxu0 0
    %119 = vmatpush1.bf16.msra.mxu0 0
    %120 = vmatprep.subr.bf16.mxu0 0
    %121 = vmatpush1.bf16.msra.mxu0 0
    %122 = vmatprep.subr.bf16.mxu0 0
    %123 = vmatpush1.bf16.msra.mxu0 0
    %124 = vmatprep.subr.bf16.mxu0 0
    %125 = vmatpush1.bf16.msra.mxu0 0
    %126 = vmatprep.subr.bf16.mxu0 0
    %127 = vmatpush1.bf16.msra.mxu0 0
    %128 = vmatprep.subr.bf16.mxu0 0
    %129 = vmatpush1.bf16.msra.mxu0 0
    %130 = vmatprep.subr.bf16.mxu0 0
    %131 = vmatpush1.bf16.msra.mxu0 0
    %132 = vmatprep.subr.bf16.mxu0 0
    %133 = vmatpush1.bf16.msra.mxu0 0
    %134 = vmatprep.subr.bf16.mxu0 0
    %135 = vmatpush1.bf16.msra.mxu0 0
    %136 = vmatprep.mubr.bf16.mxu0 0
    %137 = vmatmul.mubr.bf16.gmra.mrb[0].mxu0 %v99
    %v138 = vpop.f32.mrb[0].mxu0
    %v139 = vadd.f32 %v61, %v138
    %v140 = vpop.f32.mrb[0].mxu0
    %v141 = vpop.f32.mrb[0].mxu0
    %v142 = vadd.f32 %v61, %v141
    %v143 = vpop.f32.mrb[0].mxu0
    %144 = vmatprep.mubr.bf16.mxu0 0
    %145 = vmatmul.mubr.bf16.gmra.mrb[0].mxu0 %v102
    %v146 = vpop.f32.mrb[0].mxu0
    %v147 = vadd.f32 %v61, %v146
    %v148 = vpop.f32.mrb[0].mxu0
    %v149 = vpop.f32.mrb[0].mxu0
    %v150 = vadd.f32 %v61, %v149
    %v151 = vpop.f32.mrb[0].mxu0
    %152 = vdwg.mxu0
    %153 = vst [vmem:[#allocation7] sm:$0xff] %v139
    %154 = vst [vmem:[#allocation7 + $0x8] sm:$0xff] %v142
    %155 = vst [vmem:[#allocation7 + $0x10] sm:$0xff] %v147
    %156 = vst [vmem:[#allocation7 + $0x18] sm:$0xff] %v150
    // Predicated region
    $region22: #{tpu_custom_call.1} parent=1 // pred_check
      _
    $region23: #{tpu_custom_call.1} parent=1 // pred_check_branch
      %158 = sbr.rel (0) target = $region25
    $region24: #{tpu_custom_call.1} parent=1 // pred_region
      %s160 = ssub.s32 512, 512
      %161 = vsyncadd [#allocation4], %s160
      %s162 = sshll.u32 [#allocation7], 4
      %s163 = int_to_ptr.vmem [resolvable:$true] %s162
      %168 = dma.vmem_to_hbm [thread:$0]  %s163, 512, %s3, [#allocation4], 128, 128, 8
    $region25: #{tpu_custom_call.1} parent=1 // pred_fallthru
      _
    // Predicated region
    $region26: #{tpu_custom_call.1} parent=1 // pred_check
      _
    $region27: #{tpu_custom_call.1} parent=1 // pred_check_branch
      %170 = sbr.rel (0) target = $region29
    $region28: #{tpu_custom_call.1} parent=1 // pred_region
      %171 = dma.done [#allocation4], 512
    $region29: #{tpu_custom_call.1} parent=1 // pred_fallthru
      _
    %172 = vsyncpa [#allocation3], 1
    %173 = vsyncpa [#allocation6], 1
    %174 = vsyncpa [#allocation4], 1

</llo_original>
